<compile_context>
chip_gen: v5e
topology: v5e:2x2
jax: 0.10.0
libtpu: 0.0.40
codegen_flags: <defaults>
</compile_context>

<pallas_src>
import math

import jax
import jax.numpy as jnp
from jax.experimental import pallas as pl
from jax.experimental.pallas import tpu as pltpu

LN_EPS = 1e-6


def _round_up(a, b):
    return (a + b - 1) // b * b


# ---------------------------------------------------------------------------
# Kernel: one (TR, G*F) packed tile -> LayerNorm + fc1 + relu + fc2 + residual
# ---------------------------------------------------------------------------
def _mlp_res_kernel(x_ref, cen_ref, avg_ref, w1_ref, b1_ref, w2_ref, b2_ref, o_ref):
    x = x_ref[...]                                        # (TR, G*F) f32, lane-dense

    # Per-logical-row LayerNorm via block-diagonal matmuls (MXU does the reduce).
    d = jnp.dot(x, cen_ref[...], preferred_element_type=jnp.float32)    # x - mean
    var = jnp.dot(d * d, avg_ref[...], preferred_element_type=jnp.float32)
    xn = d * jax.lax.rsqrt(var + LN_EPS)                  # gamma/beta folded into fc1

    # _ff_block: fc2(relu(fc1(xn))) with block-diagonal weights (dropout = id).
    h = jnp.dot(xn, w1_ref[...], preferred_element_type=jnp.float32) + b1_ref[...]
    h = jnp.maximum(h, 0.0)
    z = jnp.dot(h, w2_ref[...], preferred_element_type=jnp.float32) + b2_ref[...]

    o_ref[...] = (x + z).astype(o_ref.dtype)              # residual, lane-dense store


# ---------------------------------------------------------------------------
# Wrapper
# ---------------------------------------------------------------------------
def mlp_res_block_forward(x, params, *, block_rows=512):
    """x: (..., in_dim) -> same shape. params: dict from init_params."""
    orig_shape = x.shape
    f_dim = orig_shape[-1]
    hid_dim = params["w1"].shape[1]

    # Pack G logical rows per 128-lane register row when the width allows it.
    G = 128 // f_dim if (f_dim < 128 and 128 % f_dim == 0) else 1
    GF, GH = G * f_dim, G * hid_dim

    n_rows = math.prod(orig_shape[:-1])
    xf = x.reshape(n_rows, f_dim).astype(jnp.float32)

    R = pl.cdiv(n_rows, G)                   # packed rows
    TR = min(block_rows, _round_up(R, 8))    # packed rows per grid step (mult of 8)
    R_pad = _round_up(R, TR)
    n_pad = R_pad * G
    if n_pad != n_rows:
        xf = jnp.pad(xf, ((0, n_pad - n_rows), (0, 0)))
    xp = xf.reshape(R_pad, GF)               # lane-dense packed view (row-major)

    # One-time parameter packing (folds under jit / constant-folds).
    f32 = jnp.float32
    eye_g = jnp.eye(G, dtype=f32)
    ones_ff = jnp.full((f_dim, f_dim), 1.0 / f_dim, f32)
    cen = jnp.kron(eye_g, jnp.eye(f_dim, dtype=f32) - ones_ff)           # (GF, GF)
    avg = jnp.kron(eye_g, ones_ff)                                       # (GF, GF)

    gamma = params["ln_g"].astype(f32)
    beta = params["ln_b"].astype(f32)
    w1 = params["w1"].astype(f32)
    w2 = params["w2"].astype(f32)
    w1p = gamma[:, None] * w1                                            # fold gamma
    b1p = beta @ w1 + params["b1"].astype(f32)                           # fold beta

    w1bd = jnp.kron(eye_g, w1p)                                          # (GF, GH)
    w2bd = jnp.kron(eye_g, w2)                                           # (GH, GF)
    b1t = jnp.tile(b1p, G)[None, :]                                      # (1, GH)
    b2t = jnp.tile(params["b2"].astype(f32), G)[None, :]                 # (1, GF)

    grid = (R_pad // TR,)
    out = pl.pallas_call(
        _mlp_res_kernel,
        out_shape=jax.ShapeDtypeStruct((R_pad, GF), jnp.float32),
        grid=grid,
        in_specs=[
            pl.BlockSpec((TR, GF), lambda i: (i, 0)),     # x tile (lane-dense)
            pl.BlockSpec(cen.shape, lambda i: (0, 0)),    # centering matrix
            pl.BlockSpec(avg.shape, lambda i: (0, 0)),    # averaging matrix
            pl.BlockSpec(w1bd.shape, lambda i: (0, 0)),   # fc1 weight (block-diag)
            pl.BlockSpec(b1t.shape, lambda i: (0, 0)),    # fc1 bias  (folded, tiled)
            pl.BlockSpec(w2bd.shape, lambda i: (0, 0)),   # fc2 weight (block-diag)
            pl.BlockSpec(b2t.shape, lambda i: (0, 0)),    # fc2 bias  (tiled)
        ],
        out_specs=pl.BlockSpec((TR, GF), lambda i: (i, 0)),
        compiler_params=pltpu.CompilerParams(
            dimension_semantics=("parallel",)),
    )(xp, cen, avg, w1bd, b1t, w2bd, b2t)

    return out.reshape(n_pad, f_dim)[:n_rows].reshape(orig_shape)


# ---------------------------------------------------------------------------
# Deterministic parameter init (xavier_uniform weights stored (in, out),
# zero biases, LayerNorm gamma=1 / beta=0).
# ---------------------------------------------------------------------------
def init_params(key, in_dim, hid_dim):
    k1, k2 = jax.random.split(key)

    def xavier(k, fan_in, fan_out):
        bound = (6.0 / (fan_in + fan_out)) ** 0.5
        return jax.random.uniform(k, (fan_in, fan_out), jnp.float32, -bound, bound)

    return {
        "ln_g": jnp.ones((in_dim,), jnp.float32),
        "ln_b": jnp.zeros((in_dim,), jnp.float32),
        "w1": xavier(k1, in_dim, hid_dim),     # (in, out)
        "b1": jnp.zeros((hid_dim,), jnp.float32),
        "w2": xavier(k2, hid_dim, in_dim),     # (in, out)
        "b2": jnp.zeros((in_dim,), jnp.float32),
    }


# ---------------------------------------------------------------------------
# Pure-JAX reference (mirrors the PyTorch forward, dropout = identity)
# ---------------------------------------------------------------------------
def reference_forward(x, p):
    hp = jax.lax.Precision.HIGHEST
    mu = x.mean(-1, keepdims=True)
    var = ((x - mu) ** 2).mean(-1, keepdims=True)
    xn = (x - mu) / jnp.sqrt(var + LN_EPS) * p["ln_g"] + p["ln_b"]
    h = jax.nn.relu(jnp.einsum("...i,io->...o", xn, p["w1"], precision=hp) + p["b1"])
    z = jnp.einsum("...i,io->...o", h, p["w2"], precision=hp) + p["b2"]
    return x + z


if __name__ == "__main__":
    key = jax.random.PRNGKey(0)
    k_param, k_x = jax.random.split(key)

    # Shapes consistent with usage in code_attn.py: x = (bs, n_code, V, f_dim),
    # MLP_res_block(f_dim, f_dim) with f_dim = 32.
    bs, n_code, V, f_dim = 2, 3, 8, 32
    hid_dim = 32

    params = init_params(k_param, f_dim, hid_dim)
    x = jax.random.normal(k_x, (bs, n_code, V, f_dim), jnp.float32)

    out = mlp_res_block_forward(x, params)
    out = jax.block_until_ready(out)

    ref = reference_forward(x, params)
    assert out.shape == x.shape
    err = float(jnp.max(jnp.abs(out - ref)))
    assert jnp.allclose(out, ref, atol=2e-3, rtol=2e-3), err

    print("KERNEL_OK")
</pallas_src>

<mosaic_0001>
module attributes {stable_mosaic.version = 11 : i64} {
  func.func @_mlp_res_kernel(%arg0: i32, %arg1: memref<16x128xf32, #tpu.memory_space<vmem>>, %arg2: memref<128x128xf32, #tpu.memory_space<vmem>>, %arg3: memref<128x128xf32, #tpu.memory_space<vmem>>, %arg4: memref<128x128xf32, #tpu.memory_space<vmem>>, %arg5: memref<1x128xf32, #tpu.memory_space<vmem>>, %arg6: memref<128x128xf32, #tpu.memory_space<vmem>>, %arg7: memref<1x128xf32, #tpu.memory_space<vmem>>, %arg8: memref<16x128xf32, #tpu.memory_space<vmem>>) attributes {dimension_semantics = [#tpu.dimension_semantics<parallel>], iteration_bounds = array<i64: 1>, scalar_prefetch = 0 : i64, scratch_operands = 0 : i64, tpu.core_type = #tpu.core_type<tc>, window_params = [{transform_indices = @transform_0, window_bounds = array<i64: 16, 128>}, {pipeline_mode = #tpu.pipeline_mode<synchronous>, transform_indices = @transform_1, window_bounds = array<i64: 128, 128>}, {pipeline_mode = #tpu.pipeline_mode<synchronous>, transform_indices = @transform_2, window_bounds = array<i64: 128, 128>}, {pipeline_mode = #tpu.pipeline_mode<synchronous>, transform_indices = @transform_3, window_bounds = array<i64: 128, 128>}, {pipeline_mode = #tpu.pipeline_mode<synchronous>, transform_indices = @transform_4, window_bounds = array<i64: 1, 128>}, {pipeline_mode = #tpu.pipeline_mode<synchronous>, transform_indices = @transform_5, window_bounds = array<i64: 128, 128>}, {pipeline_mode = #tpu.pipeline_mode<synchronous>, transform_indices = @transform_6, window_bounds = array<i64: 1, 128>}, {transform_indices = @transform_7, window_bounds = array<i64: 16, 128>}]} {
    %c0 = arith.constant 0 : index
    %c0_0 = arith.constant 0 : index
    %0 = vector.load %arg1[%c0, %c0_0] : memref<16x128xf32, #tpu.memory_space<vmem>>, vector<16x128xf32>
    %c0_1 = arith.constant 0 : index
    %c0_2 = arith.constant 0 : index
    %1 = vector.load %arg2[%c0_1, %c0_2] : memref<128x128xf32, #tpu.memory_space<vmem>>, vector<128x128xf32>
    %cst = arith.constant dense<0.000000e+00> : vector<16x128xf32>
    %2 = tpu.matmul %0, %1, %cst {dimension_numbers = #tpu.dot_dimension_numbers<[1], [0], [0], [1], [0, 0, 1, 1], [], []>} : vector<16x128xf32>, vector<128x128xf32>, vector<16x128xf32> -> vector<16x128xf32>
    %3 = arith.mulf %2, %2 : vector<16x128xf32>
    %c0_3 = arith.constant 0 : index
    %c0_4 = arith.constant 0 : index
    %4 = vector.load %arg3[%c0_3, %c0_4] : memref<128x128xf32, #tpu.memory_space<vmem>>, vector<128x128xf32>
    %cst_5 = arith.constant dense<0.000000e+00> : vector<16x128xf32>
    %5 = tpu.matmul %3, %4, %cst_5 {dimension_numbers = #tpu.dot_dimension_numbers<[1], [0], [0], [1], [0, 0, 1, 1], [], []>} : vector<16x128xf32>, vector<128x128xf32>, vector<16x128xf32> -> vector<16x128xf32>
    %cst_6 = arith.constant 9.99999997E-7 : f32
    %6 = vector.broadcast %cst_6 : f32 to vector<16x128xf32>
    %7 = arith.addf %5, %6 : vector<16x128xf32>
    %8 = math.rsqrt %7 : vector<16x128xf32>
    %9 = arith.mulf %2, %8 : vector<16x128xf32>
    %c0_7 = arith.constant 0 : index
    %c0_8 = arith.constant 0 : index
    %10 = vector.load %arg4[%c0_7, %c0_8] : memref<128x128xf32, #tpu.memory_space<vmem>>, vector<128x128xf32>
    %cst_9 = arith.constant dense<0.000000e+00> : vector<16x128xf32>
    %11 = tpu.matmul %9, %10, %cst_9 {dimension_numbers = #tpu.dot_dimension_numbers<[1], [0], [0], [1], [0, 0, 1, 1], [], []>} : vector<16x128xf32>, vector<128x128xf32>, vector<16x128xf32> -> vector<16x128xf32>
    %c0_10 = arith.constant 0 : index
    %c0_11 = arith.constant 0 : index
    %12 = vector.load %arg5[%c0_10, %c0_11] : memref<1x128xf32, #tpu.memory_space<vmem>>, vector<1x128xf32>
    %13 = vector.broadcast %12 : vector<1x128xf32> to vector<16x128xf32>
    %14 = arith.addf %11, %13 : vector<16x128xf32>
    %cst_12 = arith.constant 0.000000e+00 : f32
    %15 = vector.broadcast %cst_12 : f32 to vector<16x128xf32>
    %16 = arith.maximumf %14, %15 : vector<16x128xf32>
    %c0_13 = arith.constant 0 : index
    %c0_14 = arith.constant 0 : index
    %17 = vector.load %arg6[%c0_13, %c0_14] : memref<128x128xf32, #tpu.memory_space<vmem>>, vector<128x128xf32>
    %cst_15 = arith.constant dense<0.000000e+00> : vector<16x128xf32>
    %18 = tpu.matmul %16, %17, %cst_15 {dimension_numbers = #tpu.dot_dimension_numbers<[1], [0], [0], [1], [0, 0, 1, 1], [], []>} : vector<16x128xf32>, vector<128x128xf32>, vector<16x128xf32> -> vector<16x128xf32>
    %c0_16 = arith.constant 0 : index
    %c0_17 = arith.constant 0 : index
    %19 = vector.load %arg7[%c0_16, %c0_17] : memref<1x128xf32, #tpu.memory_space<vmem>>, vector<1x128xf32>
    %20 = vector.broadcast %19 : vector<1x128xf32> to vector<16x128xf32>
    %21 = arith.addf %18, %20 : vector<16x128xf32>
    %22 = arith.addf %0, %21 : vector<16x128xf32>
    %c0_18 = arith.constant 0 : index
    %c0_19 = arith.constant 0 : index
    %23 = vector.load %arg8[%c0_18, %c0_19] : memref<16x128xf32, #tpu.memory_space<vmem>>, vector<16x128xf32>
    tpu.vector_store %arg8[%c0_18, %c0_19], %22 {strides = array<i32>} : memref<16x128xf32, #tpu.memory_space<vmem>>, vector<16x128xf32>,
    return
  }
  func.func @transform_0(%arg0: i32) -> (i32, i32) {
    %c0_i32 = arith.constant 0 : i32
    %c0_i32_0 = arith.constant 0 : i32
    return %arg0, %c0_i32 : i32, i32
  }
  func.func @transform_1(%arg0: i32) -> (i32, i32) {
    %c0_i32 = arith.constant 0 : i32
    %c0_i32_0 = arith.constant 0 : i32
    %c0_i32_1 = arith.constant 0 : i32
    return %c0_i32, %c0_i32_0 : i32, i32
  }
  func.func @transform_2(%arg0: i32) -> (i32, i32) {
    %c0_i32 = arith.constant 0 : i32
    %c0_i32_0 = arith.constant 0 : i32
    %c0_i32_1 = arith.constant 0 : i32
    return %c0_i32, %c0_i32_0 : i32, i32
  }
  func.func @transform_3(%arg0: i32) -> (i32, i32) {
    %c0_i32 = arith.constant 0 : i32
    %c0_i32_0 = arith.constant 0 : i32
    %c0_i32_1 = arith.constant 0 : i32
    return %c0_i32, %c0_i32_0 : i32, i32
  }
  func.func @transform_4(%arg0: i32) -> (i32, i32) {
    %c0_i32 = arith.constant 0 : i32
    %c0_i32_0 = arith.constant 0 : i32
    %c0_i32_1 = arith.constant 0 : i32
    return %c0_i32, %c0_i32_0 : i32, i32
  }
  func.func @transform_5(%arg0: i32) -> (i32, i32) {
    %c0_i32 = arith.constant 0 : i32
    %c0_i32_0 = arith.constant 0 : i32
    %c0_i32_1 = arith.constant 0 : i32
    return %c0_i32, %c0_i32_0 : i32, i32
  }
  func.func @transform_6(%arg0: i32) -> (i32, i32) {
    %c0_i32 = arith.constant 0 : i32
    %c0_i32_0 = arith.constant 0 : i32
    %c0_i32_1 = arith.constant 0 : i32
    return %c0_i32, %c0_i32_0 : i32, i32
  }
  func.func @transform_7(%arg0: i32) -> (i32, i32) {
    %c0_i32 = arith.constant 0 : i32
    %c0_i32_0 = arith.constant 0 : i32
    return %arg0, %c0_i32 : i32, i32
  }
}

</mosaic_0001>

<llo_original>
// kernel: tpu_custom_call.1
$region0: #{tpu_custom_call.1}
  #allocation0 [shape = 'u32[]', space=smem, size = 0x4, offset = 0x4, fixed_abs, tag = 'smem constant byte address 0x4 - core index']
  #allocation1 [shape = 'u32[72,128]{1,0:T(1,128)}', space=vmem, size = 0x9000, scoped, tag = 'internal scratch']
  %s0 = inlined_call_operand.hbm [shape: f32[16,128], index: 0, kind: input, shape index: {}]
  %s1 = inlined_call_operand.hbm [shape: f32[128,128], index: 1, kind: input, shape index: {}]
  %s2 = inlined_call_operand.hbm [shape: f32[128,128], index: 2, kind: input, shape index: {}]
  %s3 = inlined_call_operand.hbm [shape: f32[128,128], index: 3, kind: input, shape index: {}]
  %s4 = inlined_call_operand.vmem [shape: f32[1,128], index: 4, kind: input, shape index: {}]
  %s5 = inlined_call_operand.hbm [shape: f32[128,128], index: 5, kind: input, shape index: {}]
  %s6 = inlined_call_operand.vmem [shape: f32[1,128], index: 6, kind: input, shape index: {}]
  %s7 = inlined_call_operand.hbm [shape: f32[16,128], index: 7, kind: output, shape index: {}]
  %s8 = sld [smem:[#allocation0]]
  $region58: #{tpu_custom_call.1} parent=0
    _
  %s10 = ssub.s32 1, %s8
  %s11 = scalar_select 0, %s10, %s8
  $region1: #{tpu_custom_call.1} parent=0
    #allocation2 [shape = 'u8[8192]{0}', space=vmem, size = 0x2000, scoped, tag = 'input window, operand 0, single buffered']
    #allocation3 [shape = 's32[1]{0}', space=sflag, size = 0x4, scoped, tag = 'scoped memory for tpu_custom_call.1']
    #allocation4 [shape = 's32[1]{0}', space=sflag, size = 0x4, scoped, tag = 'scoped memory for tpu_custom_call.1']
    #allocation5 [shape = 'u8[65536]{0}', space=vmem, size = 0x10000, scoped, tag = 'input window, operand 1, single buffered']
    #allocation6 [shape = 's32[1]{0}', space=sflag, size = 0x4, scoped, tag = 'scoped memory for tpu_custom_call.1']
    #allocation7 [shape = 'u8[65536]{0}', space=vmem, size = 0x10000, scoped, tag = 'input window, operand 2, single buffered']
    #allocation8 [shape = 'u8[65536]{0}', space=vmem, size = 0x10000, scoped, tag = 'input window, operand 3, single buffered']
    #allocation9 [shape = 's32[1]{0}', space=sflag, size = 0x4, scoped, tag = 'scoped memory for tpu_custom_call.1']
    #allocation10 [shape = 'u8[65536]{0}', space=vmem, size = 0x10000, scoped, tag = 'input window, operand 5, single buffered']
    #allocation11 [shape = 'u8[8192]{0}', space=vmem, size = 0x2000, scoped, tag = 'output window, operand 0, single buffered']
    %12 = vsyncpa [#allocation3], 0
    %13 = vsyncpa [#allocation6], 0
    %14 = vsyncpa [#allocation9], 0
    %15 = vsyncpa [#allocation4], 0
    // Predicated region
    $region2: #{tpu_custom_call.1} parent=1 // pred_check
      _
    $region3: #{tpu_custom_call.1} parent=1 // pred_check_branch
      %17 = sbr.rel (0) target = $region5
    $region4: #{tpu_custom_call.1} parent=1 // pred_region
      %19 = vsyncadd [#allocation3], 0
      %s20 = sshll.u32 %s0, 4
      %s21 = int_to_ptr.hbm [resolvable:$true] %s20
      %s22 = sshll.u32 [#allocation2], 4
      %s23 = int_to_ptr.vmem [resolvable:$true] %s22
      %28 = dma.hbm_to_vmem [thread:$0]  %s21, 256, %s23, [#allocation3], 128, 128, 8
    $region5: #{tpu_custom_call.1} parent=1 // pred_fallthru
      _
    // Predicated region
    $region6: #{tpu_custom_call.1} parent=1 // pred_check
      _
    $region7: #{tpu_custom_call.1} parent=1 // pred_check_branch
      %30 = sbr.rel (0) target = $region9
    $region8: #{tpu_custom_call.1} parent=1 // pred_region
      %32 = vsyncadd [#allocation6], 0
      %s33 = sshll.u32 %s1, 4
      %s34 = int_to_ptr.hbm [resolvable:$true] %s33
      %s35 = sshll.u32 [#allocation5], 4
      %s36 = int_to_ptr.vmem [resolvable:$true] %s35
      %41 = dma.hbm_to_vmem [thread:$0]  %s34, 2048, %s36, [#allocation6], 128, 128, 8
    $region9: #{tpu_custom_call.1} parent=1 // pred_fallthru
      _
    // Predicated region
    $region10: #{tpu_custom_call.1} parent=1 // pred_check
      _
    $region11: #{tpu_custom_call.1} parent=1 // pred_check_branch
      %43 = sbr.rel (0) target = $region13
    $region12: #{tpu_custom_call.1} parent=1 // pred_region
      %45 = vsyncadd [#allocation6], 0
      %s46 = sshll.u32 %s2, 4
      %s47 = int_to_ptr.hbm [resolvable:$true] %s46
      %s48 = sshll.u32 [#allocation7], 4
      %s49 = int_to_ptr.vmem [resolvable:$true] %s48
      %54 = dma.hbm_to_vmem [thread:$0]  %s47, 2048, %s49, [#allocation6], 128, 128, 8
    $region13: #{tpu_custom_call.1} parent=1 // pred_fallthru
      _
    // Predicated region
    $region14: #{tpu_custom_call.1} parent=1 // pred_check
      _
    $region15: #{tpu_custom_call.1} parent=1 // pred_check_branch
      %56 = sbr.rel (0) target = $region17
    $region16: #{tpu_custom_call.1} parent=1 // pred_region
      %58 = vsyncadd [#allocation9], 0
      %s59 = sshll.u32 %s3, 4
      %s60 = int_to_ptr.hbm [resolvable:$true] %s59
      %s61 = sshll.u32 [#allocation8], 4
      %s62 = int_to_ptr.vmem [resolvable:$true] %s61
      %67 = dma.hbm_to_vmem [thread:$0]  %s60, 2048, %s62, [#allocation9], 128, 128, 8
    $region17: #{tpu_custom_call.1} parent=1 // pred_fallthru
      _
    // Predicated region
    $region18: #{tpu_custom_call.1} parent=1 // pred_check
      _
    $region19: #{tpu_custom_call.1} parent=1 // pred_check_branch
      %69 = sbr.rel (0) target = $region21
    $region20: #{tpu_custom_call.1} parent=1 // pred_region
      _
    $region21: #{tpu_custom_call.1} parent=1 // pred_fallthru
      _
    // Predicated region
    $region22: #{tpu_custom_call.1} parent=1 // pred_check
      _
    $region23: #{tpu_custom_call.1} parent=1 // pred_check_branch
      %71 = sbr.rel (0) target = $region25
    $region24: #{tpu_custom_call.1} parent=1 // pred_region
      %73 = vsyncadd [#allocation9], 0
      %s74 = sshll.u32 %s5, 4
      %s75 = int_to_ptr.hbm [resolvable:$true] %s74
      %s76 = sshll.u32 [#allocation10], 4
      %s77 = int_to_ptr.vmem [resolvable:$true] %s76
      %82 = dma.hbm_to_vmem [thread:$0]  %s75, 2048, %s77, [#allocation9], 128, 128, 8
    $region25: #{tpu_custom_call.1} parent=1 // pred_fallthru
      _
    // Predicated region
    $region26: #{tpu_custom_call.1} parent=1 // pred_check
      _
    $region27: #{tpu_custom_call.1} parent=1 // pred_check_branch
      %84 = sbr.rel (0) target = $region29
    $region28: #{tpu_custom_call.1} parent=1 // pred_region
      _
    $region29: #{tpu_custom_call.1} parent=1 // pred_fallthru
      _
    // Predicated region
    $region30: #{tpu_custom_call.1} parent=1 // pred_check
      _
    $region31: #{tpu_custom_call.1} parent=1 // pred_check_branch
      %86 = sbr.rel (0) target = $region33
    $region32: #{tpu_custom_call.1} parent=1 // pred_region
      %88 = dma.done [#allocation3], 256
    $region33: #{tpu_custom_call.1} parent=1 // pred_fallthru
      _
    // Predicated region
    $region34: #{tpu_custom_call.1} parent=1 // pred_check
      _
    $region35: #{tpu_custom_call.1} parent=1 // pred_check_branch
      %90 = sbr.rel (0) target = $region37
    $region36: #{tpu_custom_call.1} parent=1 // pred_region
      %92 = dma.done [#allocation6], 2048
    $region37: #{tpu_custom_call.1} parent=1 // pred_fallthru
      _
    // Predicated region
    $region38: #{tpu_custom_call.1} parent=1 // pred_check
      _
    $region39: #{tpu_custom_call.1} parent=1 // pred_check_branch
      %94 = sbr.rel (0) target = $region41
    $region40: #{tpu_custom_call.1} parent=1 // pred_region
      %96 = dma.done [#allocation6], 2048
    $region41: #{tpu_custom_call.1} parent=1 // pred_fallthru
      _
    // Predicated region
    $region42: #{tpu_custom_call.1} parent=1 // pred_check
      _
    $region43: #{tpu_custom_call.1} parent=1 // pred_check_branch
      %98 = sbr.rel (0) target = $region45
    $region44: #{tpu_custom_call.1} parent=1 // pred_region
      %100 = dma.done [#allocation9], 2048
    $region45: #{tpu_custom_call.1} parent=1 // pred_fallthru
      _
    // Predicated region
    $region46: #{tpu_custom_call.1} parent=1 // pred_check
      _
    $region47: #{tpu_custom_call.1} parent=1 // pred_check_branch
      %102 = sbr.rel (0) target = $region49
    $region48: #{tpu_custom_call.1} parent=1 // pred_region
      %104 = dma.done [#allocation9], 2048
    $region49: #{tpu_custom_call.1} parent=1 // pred_fallthru
      _
    %v105 = vld [vmem:[#allocation2] sm:$0xff]
    %v106 = vld [vmem:[#allocation2 + $0x8] sm:$0xff]
    %v107 = vld [vmem:[#allocation5] sm:$0xff]
    %v108 = vld [vmem:[#allocation5 + $0x8] sm:$0xff]
    %v109 = vld [vmem:[#allocation5 + $0x10] sm:$0xff]
    %v110 = vld [vmem:[#allocation5 + $0x18] sm:$0xff]
    %v111 = vld [vmem:[#allocation5 + $0x20] sm:$0xff]
    %v112 = vld [vmem:[#allocation5 + $0x28] sm:$0xff]
    %v113 = vld [vmem:[#allocation5 + $0x30] sm:$0xff]
    %v114 = vld [vmem:[#allocation5 + $0x38] sm:$0xff]
    %v115 = vld [vmem:[#allocation5 + $0x40] sm:$0xff]
    %v116 = vld [vmem:[#allocation5 + $0x48] sm:$0xff]
    %v117 = vld [vmem:[#allocation5 + $0x50] sm:$0xff]
    %v118 = vld [vmem:[#allocation5 + $0x58] sm:$0xff]
    %v119 = vld [vmem:[#allocation5 + $0x60] sm:$0xff]
    %v120 = vld [vmem:[#allocation5 + $0x68] sm:$0xff]
    %v121 = vld [vmem:[#allocation5 + $0x70] sm:$0xff]
    %v122 = vld [vmem:[#allocation5 + $0x78] sm:$0xff]
    %123 = vmatpush.msra.mxu0 %v122
    %124 = vmatpush.msra.mxu0 %v121
    %125 = vmatpush.msra.mxu0 %v120
    %126 = vmatpush.msra.mxu0 %v119
    %127 = vmatpush.msra.mxu0 %v118
    %128 = vmatpush.msra.mxu0 %v117
    %129 = vmatpush.msra.mxu0 %v116
    %130 = vmatpush.msra.mxu0 %v115
    %131 = vmatpush.msra.mxu0 %v114
    %132 = vmatpush.msra.mxu0 %v113
    %133 = vmatpush.msra.mxu0 %v112
    %134 = vmatpush.msra.mxu0 %v111
    %135 = vmatpush.msra.mxu0 %v110
    %136 = vmatpush.msra.mxu0 %v109
    %137 = vmatpush.msra.mxu0 %v108
    %138 = vmatpush.msra.mxu0 %v107
    %139 = vmatmul.f32.gmra.mxu0 %v105
    %v140 = vpop.f32.mrf.mxu0
    %v141 = vadd.f32 0.0, %v140
    %142 = vmatmul.f32.gmra.mxu0 %v106
    %v143 = vpop.f32.mrf.mxu0
    %v144 = vadd.f32 0.0, %v143
    %145 = vdwg.mxu0
    %v146 = vmul.f32 %v141, %v141
    %v147 = vmul.f32 %v144, %v144
    %v148 = vld [vmem:[#allocation7] sm:$0xff]
    %v149 = vld [vmem:[#allocation7 + $0x8] sm:$0xff]
    %v150 = vld [vmem:[#allocation7 + $0x10] sm:$0xff]
    %v151 = vld [vmem:[#allocation7 + $0x18] sm:$0xff]
    %v152 = vld [vmem:[#allocation7 + $0x20] sm:$0xff]
    %v153 = vld [vmem:[#allocation7 + $0x28] sm:$0xff]
    %v154 = vld [vmem:[#allocation7 + $0x30] sm:$0xff]
    %v155 = vld [vmem:[#allocation7 + $0x38] sm:$0xff]
    %v156 = vld [vmem:[#allocation7 + $0x40] sm:$0xff]
    %v157 = vld [vmem:[#allocation7 + $0x48] sm:$0xff]
    %v158 = vld [vmem:[#allocation7 + $0x50] sm:$0xff]
    %v159 = vld [vmem:[#allocation7 + $0x58] sm:$0xff]
    %v160 = vld [vmem:[#allocation7 + $0x60] sm:$0xff]
    %v161 = vld [vmem:[#allocation7 + $0x68] sm:$0xff]
    %v162 = vld [vmem:[#allocation7 + $0x70] sm:$0xff]
    %v163 = vld [vmem:[#allocation7 + $0x78] sm:$0xff]
    %164 = vmatpush.msra.mxu0 %v163
    %165 = vmatpush.msra.mxu0 %v162
    %166 = vmatpush.msra.mxu0 %v161
    %167 = vmatpush.msra.mxu0 %v160
    %168 = vmatpush.msra.mxu0 %v159
    %169 = vmatpush.msra.mxu0 %v158
    %170 = vmatpush.msra.mxu0 %v157
    %171 = vmatpush.msra.mxu0 %v156
    %172 = vmatpush.msra.mxu0 %v155
    %173 = vmatpush.msra.mxu0 %v154
    %174 = vmatpush.msra.mxu0 %v153
    %175 = vmatpush.msra.mxu0 %v152
    %176 = vmatpush.msra.mxu0 %v151
    %177 = vmatpush.msra.mxu0 %v150
    %178 = vmatpush.msra.mxu0 %v149
    %179 = vmatpush.msra.mxu0 %v148
    %180 = vmatmul.f32.gmra.mxu0 %v146
    %v181 = vpop.f32.mrf.mxu0
    %v182 = vadd.f32 1e-06, %v181
    %183 = vmatmul.f32.gmra.mxu0 %v147
    %v184 = vpop.f32.mrf.mxu0
    %v185 = vadd.f32 1e-06, %v184
    %186 = vdwg.mxu0
    %v187 = vrsqrt.pop %v182
    %v188 = vmul.f32 %v187, %v182
    %v189 = vmul.f32 %v188, %v187
    %v190 = vmul.f32 0.5, %v189
    %v191 = vsub.f32 1.5, %v190
    %v192 = vmul.f32 %v187, %v191
    %vm193 = vweird.f32 %v182
    %vm194 = vweird.f32 %v187
    %vm195 = vmor %vm193, %vm194
    %v196 = vsel %vm195, %v187, %v192
    %v197 = vrsqrt.pop %v185
    %v198 = vmul.f32 %v197, %v185
    %v199 = vmul.f32 %v198, %v197
    %v200 = vmul.f32 0.5, %v199
    %v201 = vsub.f32 1.5, %v200
    %v202 = vmul.f32 %v197, %v201
    %vm203 = vweird.f32 %v185
    %vm204 = vweird.f32 %v197
    %vm205 = vmor %vm203, %vm204
    %v206 = vsel %vm205, %v197, %v202
    %v207 = vmul.f32 %v141, %v196
    %v208 = vmul.f32 %v144, %v206
    %v209 = vld [vmem:[#allocation8] sm:$0xff]
    %v210 = vld [vmem:[#allocation8 + $0x8] sm:$0xff]
    %v211 = vld [vmem:[#allocation8 + $0x10] sm:$0xff]
    %v212 = vld [vmem:[#allocation8 + $0x18] sm:$0xff]
    %v213 = vld [vmem:[#allocation8 + $0x20] sm:$0xff]
    %v214 = vld [vmem:[#allocation8 + $0x28] sm:$0xff]
    %v215 = vld [vmem:[#allocation8 + $0x30] sm:$0xff]
    %v216 = vld [vmem:[#allocation8 + $0x38] sm:$0xff]
    %v217 = vld [vmem:[#allocation8 + $0x40] sm:$0xff]
    %v218 = vld [vmem:[#allocation8 + $0x48] sm:$0xff]
    %v219 = vld [vmem:[#allocation8 + $0x50] sm:$0xff]
    %v220 = vld [vmem:[#allocation8 + $0x58] sm:$0xff]
    %v221 = vld [vmem:[#allocation8 + $0x60] sm:$0xff]
    %v222 = vld [vmem:[#allocation8 + $0x68] sm:$0xff]
    %v223 = vld [vmem:[#allocation8 + $0x70] sm:$0xff]
    %v224 = vld [vmem:[#allocation8 + $0x78] sm:$0xff]
    %v225 = vld [vmem:[%s4] sm:$0x1]
    %v227 = vperm.slane %v225, 0
    %229 = vmatpush.msra.mxu0 %v224
    %230 = vmatpush.msra.mxu0 %v223
    %231 = vmatpush.msra.mxu0 %v222
    %232 = vmatpush.msra.mxu0 %v221
    %233 = vmatpush.msra.mxu0 %v220
    %234 = vmatpush.msra.mxu0 %v219
    %235 = vmatpush.msra.mxu0 %v218
    %236 = vmatpush.msra.mxu0 %v217
    %237 = vmatpush.msra.mxu0 %v216
    %238 = vmatpush.msra.mxu0 %v215
    %239 = vmatpush.msra.mxu0 %v214
    %240 = vmatpush.msra.mxu0 %v213
    %241 = vmatpush.msra.mxu0 %v212
    %242 = vmatpush.msra.mxu0 %v211
    %243 = vmatpush.msra.mxu0 %v210
    %244 = vmatpush.msra.mxu0 %v209
    %245 = vmatmul.f32.gmra.mxu0 %v207
    %v246 = vpop.f32.mrf.mxu0
    %v247 = vadd.f32 %v227, %v246
    %248 = vmatmul.f32.gmra.mxu0 %v208
    %v249 = vpop.f32.mrf.mxu0
    %v250 = vadd.f32 %v227, %v249
    %251 = vdwg.mxu0
    %v252 = vmax.f32 %v247, 0.0
    %v253 = vmax.f32 %v250, 0.0
    %v254 = vld [vmem:[#allocation10] sm:$0xff]
    %v255 = vld [vmem:[#allocation10 + $0x8] sm:$0xff]
    %v256 = vld [vmem:[#allocation10 + $0x10] sm:$0xff]
    %v257 = vld [vmem:[#allocation10 + $0x18] sm:$0xff]
    %v258 = vld [vmem:[#allocation10 + $0x20] sm:$0xff]
    %v259 = vld [vmem:[#allocation10 + $0x28] sm:$0xff]
    %v260 = vld [vmem:[#allocation10 + $0x30] sm:$0xff]
    %v261 = vld [vmem:[#allocation10 + $0x38] sm:$0xff]
    %v262 = vld [vmem:[#allocation10 + $0x40] sm:$0xff]
    %v263 = vld [vmem:[#allocation10 + $0x48] sm:$0xff]
    %v264 = vld [vmem:[#allocation10 + $0x50] sm:$0xff]
    %v265 = vld [vmem:[#allocation10 + $0x58] sm:$0xff]
    %v266 = vld [vmem:[#allocation10 + $0x60] sm:$0xff]
    %v267 = vld [vmem:[#allocation10 + $0x68] sm:$0xff]
    %v268 = vld [vmem:[#allocation10 + $0x70] sm:$0xff]
    %v269 = vld [vmem:[#allocation10 + $0x78] sm:$0xff]
    %v270 = vld [vmem:[%s6] sm:$0x1]
    %v272 = vperm.slane %v270, 0
    %274 = vmatpush.msra.mxu0 %v269
    %275 = vmatpush.msra.mxu0 %v268
    %276 = vmatpush.msra.mxu0 %v267
    %277 = vmatpush.msra.mxu0 %v266
    %278 = vmatpush.msra.mxu0 %v265
    %279 = vmatpush.msra.mxu0 %v264
    %280 = vmatpush.msra.mxu0 %v263
    %281 = vmatpush.msra.mxu0 %v262
    %282 = vmatpush.msra.mxu0 %v261
    %283 = vmatpush.msra.mxu0 %v260
    %284 = vmatpush.msra.mxu0 %v259
    %285 = vmatpush.msra.mxu0 %v258
    %286 = vmatpush.msra.mxu0 %v257
    %287 = vmatpush.msra.mxu0 %v256
    %288 = vmatpush.msra.mxu0 %v255
    %289 = vmatpush.msra.mxu0 %v254
    %290 = vmatmul.f32.gmra.mxu0 %v252
    %v291 = vpop.f32.mrf.mxu0
    %v292 = vadd.f32 %v272, %v291
    %293 = vmatmul.f32.gmra.mxu0 %v253
    %v294 = vpop.f32.mrf.mxu0
    %v295 = vadd.f32 %v272, %v294
    %296 = vdwg.mxu0
    %v297 = vadd.f32 %v105, %v292
    %v298 = vadd.f32 %v106, %v295
    %299 = vst [vmem:[#allocation11] sm:$0xff] %v297
    %300 = vst [vmem:[#allocation11 + $0x8] sm:$0xff] %v298
    // Predicated region
    $region50: #{tpu_custom_call.1} parent=1 // pred_check
      _
    $region51: #{tpu_custom_call.1} parent=1 // pred_check_branch
      %302 = sbr.rel (0) target = $region53
    $region52: #{tpu_custom_call.1} parent=1 // pred_region
      %304 = vsyncadd [#allocation4], 0
      %s305 = sshll.u32 [#allocation11], 4
      %s306 = int_to_ptr.vmem [resolvable:$true] %s305
      %s307 = sshll.u32 %s7, 4
      %s308 = int_to_ptr.hbm [resolvable:$true] %s307
      %313 = dma.vmem_to_hbm [thread:$0]  %s306, 256, %s308, [#allocation4], 128, 128, 8
    $region53: #{tpu_custom_call.1} parent=1 // pred_fallthru
      _
    // Predicated region
    $region54: #{tpu_custom_call.1} parent=1 // pred_check
      _
    $region55: #{tpu_custom_call.1} parent=1 // pred_check_branch
      %315 = sbr.rel (0) target = $region57
    $region56: #{tpu_custom_call.1} parent=1 // pred_region
      %317 = dma.done [#allocation4], 256
    $region57: #{tpu_custom_call.1} parent=1 // pred_fallthru
      _
    %318 = vsyncpa [#allocation3], 1
    %319 = vsyncpa [#allocation6], 1
    %320 = vsyncpa [#allocation9], 1
    %321 = vsyncpa [#allocation4], 1

</llo_original>
